<compile_context>
chip_gen: v7x
topology: tpu7x:2x2x1
jax: 0.10.0
libtpu: 0.0.40
codegen_flags: <defaults>
</compile_context>

<pallas_src>
import jax
import jax.numpy as jnp
from jax.experimental import pallas as pl
from jax.experimental.pallas import tpu as pltpu


def _round_up(n, m):
    return ((n + m - 1) // m) * m


def _cdiv(a, b):
    return -(-a // b)


def _vmem_budget_and_limit():
    """(usable working-set budget, vmem_limit_bytes) per TPU generation."""
    mib = 1024 * 1024
    cap = None
    try:
        cap = getattr(pltpu.get_tpu_info(), "vmem_capacity_bytes", None)
    except Exception:
        cap = None
    if not cap or cap <= 0:
        cap = 64 * mib                      # conservative: assume v7x-sized VMEM
    if cap <= 64 * mib:                     # v7x: 64 MiB per TensorCore
        return 40 * mib, 56 * mib
    return 80 * mib, 100 * mib              # v5e / v6e: 128 MiB physical


def _choose_block_b(batch, d_in, d_out, x_itemsize, w_itemsize, vmem_budget_bytes):
    """Largest batch tile whose full working set fits the VMEM budget."""
    # Grid-invariant weight + bias blocks (single-buffered).
    resident = d_in * d_out * w_itemsize + d_out * 4
    if resident > vmem_budget_bytes // 2:
        # TODO(synk): add an N-tiled (class axis) two-pass logsumexp path (and a
        # K-tiled accumulator path) for heads too large to keep resident in VMEM.
        raise NotImplementedError(
            "Resident-weight layout exceeds the VMEM budget; tile the class / "
            "feature axes instead.")
    # Per batch-row cost: double-buffered x/out blocks + in-kernel intermediates
    # (compute-dtype cast of x, f32 logits / shifted / exp / output temporaries).
    per_row = (2 * (d_in * x_itemsize + d_out * 4)   # pipelined I/O blocks
               + d_in * 2                            # in-kernel compute-dtype cast of x
               + 4 * d_out * 4)                      # f32 softmax intermediates
    tb_cap = (vmem_budget_bytes - resident) // per_row
    tb_cap = max(8, min(int(tb_cap), 4096))          # cap raised from 512
    # Keep >= 2 grid steps for big batches so both v7x TensorCores get work.
    if batch >= 1024:
        tb_cap = min(tb_cap, max(256, _round_up(_cdiv(batch, 2), 256)))
    # Split the batch evenly over the minimum number of steps (limits pad waste).
    n_steps = max(1, _cdiv(batch, tb_cap))
    tb = _cdiv(batch, n_steps)
    # Alignment: 256-multiples feed full MXU passes on v6e/v7x; else sublane (8).
    if tb >= 256:
        tb = _round_up(tb, 256)
    else:
        tb = _round_up(tb, 8)
    return min(tb, max(8, _round_up(batch, 8)))


def _kernel(x_ref, w_ref, b_ref, o_ref):
    # Cast streamed activations to the MXU compute dtype (no-op if already there).
    x = x_ref[...].astype(w_ref.dtype)
    # Linear: logits = x @ W + b  (f32 accumulation on the MXU).
    logits = jnp.dot(x, w_ref[...], preferred_element_type=jnp.float32)
    logits = logits + b_ref[...]
    # Numerically-stable log-softmax over the class (lane) axis, all in f32.
    m = jnp.max(logits, axis=-1, keepdims=True)
    shifted = logits - m
    lse = jnp.log(jnp.sum(jnp.exp(shifted), axis=-1, keepdims=True))
    o_ref[...] = (shifted - lse).astype(o_ref.dtype)


def lin_classifier_forward(x, weight, bias, *, compute_dtype=jnp.bfloat16):
    """LinClassifier forward: log_softmax(x @ W + b, axis=1).

    x:      [B, D_in]       (streamed as-is; cast to compute_dtype in-kernel)
    weight: [D_in, D_out]   (transposed vs. PyTorch's [out, in] storage)
    bias:   [D_out]
    returns [B, D_out] float32 log-probabilities.
    """
    B, D_in = x.shape
    D_in_w, D_out = weight.shape
    assert D_in_w == D_in, "weight must be [D_in, D_out]"

    w = weight.astype(compute_dtype)                    # tiny one-time cast
    b2 = bias.astype(jnp.float32).reshape(1, D_out)

    budget, vmem_limit = _vmem_budget_and_limit()
    block_b = _choose_block_b(B, D_in, D_out,
                              jnp.dtype(x.dtype).itemsize,
                              jnp.dtype(compute_dtype).itemsize,
                              budget)
    b_p = _round_up(B, block_b)
    grid = (b_p // block_b,)

    # Pad only the batch axis (padded rows -> logits == bias: finite, discarded).
    # Feature/class axes stay unpadded: blocks spanning a full array dim are legal
    # even when not multiples of (8, 128).
    x_in = x if b_p == B else jnp.pad(x, ((0, b_p - B), (0, 0)))

    def run(single_buffer_weights):
        kw = dict(pipeline_mode=pl.Buffered(1)) if single_buffer_weights else {}
        in_specs = [
            pl.BlockSpec((block_b, D_in), lambda i: (i, 0)),        # streamed x
            pl.BlockSpec((D_in, D_out), lambda i: (0, 0), **kw),    # resident W
            pl.BlockSpec((1, D_out), lambda i: (0, 0), **kw),       # resident bias
        ]
        out_specs = pl.BlockSpec((block_b, D_out), lambda i: (i, 0))
        return pl.pallas_call(
            _kernel,
            out_shape=jax.ShapeDtypeStruct((b_p, D_out), jnp.float32),
            grid=grid,
            in_specs=in_specs,
            out_specs=out_specs,
            compiler_params=pltpu.CompilerParams(
                dimension_semantics=("parallel",),   # batch tiles are independent
                vmem_limit_bytes=vmem_limit),
        )(x_in, w, b2)

    try:
        out = run(single_buffer_weights=True)
    except Exception:
        # Fallback if this JAX version rejects Buffered(1) on grid-invariant blocks.
        out = run(single_buffer_weights=False)

    return out if b_p == B else out[:B]


if __name__ == "__main__":
    # Small shapes consistent with the module's forward: x of [batch, input_dim].
    batch, input_dim, output_dim = 8, 32, 16

    key = jax.random.PRNGKey(0)
    kx, kw, kb = jax.random.split(key, 3)

    # Deterministic init mimicking nn.Linear's uniform(-1/sqrt(in), 1/sqrt(in)).
    bound = 1.0 / (input_dim ** 0.5)
    # PyTorch stores weight as [out, in]; we keep the transposed [in, out] layout.
    weight = jax.random.uniform(kw, (input_dim, output_dim),
                                minval=-bound, maxval=bound, dtype=jnp.float32)
    bias = jax.random.uniform(kb, (output_dim,),
                              minval=-bound, maxval=bound, dtype=jnp.float32)
    x = jax.random.normal(kx, (batch, input_dim), dtype=jnp.float32)

    out = lin_classifier_forward(x, weight, bias)
    out = jax.block_until_ready(out)

    # Reference uses the same bf16-operand / f32-accumulation matmul path.
    logits_ref = jnp.dot(x.astype(jnp.bfloat16), weight.astype(jnp.bfloat16),
                         preferred_element_type=jnp.float32) + bias
    ref = jax.nn.log_softmax(logits_ref, axis=-1)

    assert out.shape == (batch, output_dim)
    assert bool(jnp.all(jnp.isfinite(out))), "non-finite values in output"
    assert jnp.allclose(out, ref, atol=1e-3), "mismatch vs reference"

    print("KERNEL_OK")
</pallas_src>

<mosaic_0001>
module attributes {stable_mosaic.version = 11 : i64} {
  func.func @_kernel(%arg0: i32, %arg1: memref<8x32xf32, #tpu.memory_space<vmem>>, %arg2: memref<32x16xbf16, #tpu.memory_space<vmem>>, %arg3: memref<1x16xf32, #tpu.memory_space<vmem>>, %arg4: memref<8x16xf32, #tpu.memory_space<vmem>>) attributes {dimension_semantics = [#tpu.dimension_semantics<parallel>], iteration_bounds = array<i64: 1>, scalar_prefetch = 0 : i64, scratch_operands = 0 : i64, tpu.core_type = #tpu.core_type<tc>, window_params = [{transform_indices = @transform_0, window_bounds = array<i64: 8, 32>}, {pipeline_mode = #tpu.pipeline_mode<synchronous>, transform_indices = @transform_1, window_bounds = array<i64: 32, 16>}, {pipeline_mode = #tpu.pipeline_mode<synchronous>, transform_indices = @transform_2, window_bounds = array<i64: 1, 16>}, {transform_indices = @transform_3, window_bounds = array<i64: 8, 16>}]} {
    %c0 = arith.constant 0 : index
    %c0_0 = arith.constant 0 : index
    %0 = vector.load %arg1[%c0, %c0_0] : memref<8x32xf32, #tpu.memory_space<vmem>>, vector<8x32xf32>
    %1 = arith.truncf %0 : vector<8x32xf32> to vector<8x32xbf16>
    %c0_1 = arith.constant 0 : index
    %c0_2 = arith.constant 0 : index
    %2 = vector.load %arg2[%c0_1, %c0_2] : memref<32x16xbf16, #tpu.memory_space<vmem>>, vector<32x16xbf16>
    %cst = arith.constant dense<0.000000e+00> : vector<8x16xf32>
    %3 = tpu.matmul %1, %2, %cst {dimension_numbers = #tpu.dot_dimension_numbers<[1], [0], [0], [1], [0, 0, 1, 1], [], []>} : vector<8x32xbf16>, vector<32x16xbf16>, vector<8x16xf32> -> vector<8x16xf32>
    %c0_3 = arith.constant 0 : index
    %c0_4 = arith.constant 0 : index
    %4 = vector.load %arg3[%c0_3, %c0_4] : memref<1x16xf32, #tpu.memory_space<vmem>>, vector<1x16xf32>
    %5 = vector.broadcast %4 : vector<1x16xf32> to vector<8x16xf32>
    %6 = arith.addf %3, %5 : vector<8x16xf32>
    %cst_5 = arith.constant dense<0xFF800000> : vector<8xf32>
    %7 = vector.multi_reduction <maximumf>, %6, %cst_5 [1] : vector<8x16xf32> to vector<8xf32>
    %8 = vector.shape_cast %7 : vector<8xf32> to vector<8x1xf32>
    %9 = vector.broadcast %8 : vector<8x1xf32> to vector<8x16xf32>
    %10 = arith.subf %6, %9 : vector<8x16xf32>
    %11 = math.exp %10 : vector<8x16xf32>
    %cst_6 = arith.constant dense<0.000000e+00> : vector<8xf32>
    %12 = vector.multi_reduction <add>, %11, %cst_6 [1] : vector<8x16xf32> to vector<8xf32>
    %13 = vector.shape_cast %12 : vector<8xf32> to vector<8x1xf32>
    %14 = math.log %13 : vector<8x1xf32>
    %15 = vector.broadcast %14 : vector<8x1xf32> to vector<8x16xf32>
    %16 = arith.subf %10, %15 : vector<8x16xf32>
    %c0_7 = arith.constant 0 : index
    %c0_8 = arith.constant 0 : index
    %17 = vector.load %arg4[%c0_7, %c0_8] : memref<8x16xf32, #tpu.memory_space<vmem>>, vector<8x16xf32>
    tpu.vector_store %arg4[%c0_7, %c0_8], %16 {strides = array<i32>} : memref<8x16xf32, #tpu.memory_space<vmem>>, vector<8x16xf32>,
    return
  }
  func.func @transform_0(%arg0: i32) -> (i32, i32) {
    %c0_i32 = arith.constant 0 : i32
    %c0_i32_0 = arith.constant 0 : i32
    return %arg0, %c0_i32 : i32, i32
  }
  func.func @transform_1(%arg0: i32) -> (i32, i32) {
    %c0_i32 = arith.constant 0 : i32
    %c0_i32_0 = arith.constant 0 : i32
    %c0_i32_1 = arith.constant 0 : i32
    return %c0_i32, %c0_i32_0 : i32, i32
  }
  func.func @transform_2(%arg0: i32) -> (i32, i32) {
    %c0_i32 = arith.constant 0 : i32
    %c0_i32_0 = arith.constant 0 : i32
    %c0_i32_1 = arith.constant 0 : i32
    return %c0_i32, %c0_i32_0 : i32, i32
  }
  func.func @transform_3(%arg0: i32) -> (i32, i32) {
    %c0_i32 = arith.constant 0 : i32
    %c0_i32_0 = arith.constant 0 : i32
    return %arg0, %c0_i32 : i32, i32
  }
}

module attributes {stable_mosaic.version = 11 : i64} {
  func.func @_kernel(%arg0: i32, %arg1: memref<8x32xf32, #tpu.memory_space<vmem>>, %arg2: memref<32x16xbf16, #tpu.memory_space<vmem>>, %arg3: memref<1x16xf32, #tpu.memory_space<vmem>>, %arg4: memref<8x16xf32, #tpu.memory_space<vmem>>) attributes {dimension_semantics = [#tpu.dimension_semantics<parallel>], iteration_bounds = array<i64: 1>, scalar_prefetch = 0 : i64, scratch_operands = 0 : i64, tpu.core_type = #tpu.core_type<tc>, window_params = [{transform_indices = @transform_0, window_bounds = array<i64: 8, 32>}, {pipeline_mode = #tpu.pipeline_mode<synchronous>, transform_indices = @transform_1, window_bounds = array<i64: 32, 16>}, {pipeline_mode = #tpu.pipeline_mode<synchronous>, transform_indices = @transform_2, window_bounds = array<i64: 1, 16>}, {transform_indices = @transform_3, window_bounds = array<i64: 8, 16>}]} {
    %c0 = arith.constant 0 : index
    %c0_0 = arith.constant 0 : index
    %0 = vector.load %arg1[%c0, %c0_0] : memref<8x32xf32, #tpu.memory_space<vmem>>, vector<8x32xf32>
    %1 = arith.truncf %0 : vector<8x32xf32> to vector<8x32xbf16>
    %c0_1 = arith.constant 0 : index
    %c0_2 = arith.constant 0 : index
    %2 = vector.load %arg2[%c0_1, %c0_2] : memref<32x16xbf16, #tpu.memory_space<vmem>>, vector<32x16xbf16>
    %cst = arith.constant dense<0.000000e+00> : vector<8x16xf32>
    %3 = tpu.matmul %1, %2, %cst {dimension_numbers = #tpu.dot_dimension_numbers<[1], [0], [0], [1], [0, 0, 1, 1], [], []>} : vector<8x32xbf16>, vector<32x16xbf16>, vector<8x16xf32> -> vector<8x16xf32>
    %c0_3 = arith.constant 0 : index
    %c0_4 = arith.constant 0 : index
    %4 = vector.load %arg3[%c0_3, %c0_4] : memref<1x16xf32, #tpu.memory_space<vmem>>, vector<1x16xf32>
    %5 = vector.broadcast %4 : vector<1x16xf32> to vector<8x16xf32>
    %6 = arith.addf %3, %5 : vector<8x16xf32>
    %cst_5 = arith.constant dense<0xFF800000> : vector<8xf32>
    %7 = vector.multi_reduction <maximumf>, %6, %cst_5 [1] : vector<8x16xf32> to vector<8xf32>
    %8 = vector.shape_cast %7 : vector<8xf32> to vector<8x1xf32>
    %9 = vector.broadcast %8 : vector<8x1xf32> to vector<8x16xf32>
    %10 = arith.subf %6, %9 : vector<8x16xf32>
    %11 = math.exp %10 : vector<8x16xf32>
    %cst_6 = arith.constant dense<0.000000e+00> : vector<8xf32>
    %12 = vector.multi_reduction <add>, %11, %cst_6 [1] : vector<8x16xf32> to vector<8xf32>
    %13 = vector.shape_cast %12 : vector<8xf32> to vector<8x1xf32>
    %14 = math.log %13 : vector<8x1xf32>
    %15 = vector.broadcast %14 : vector<8x1xf32> to vector<8x16xf32>
    %16 = arith.subf %10, %15 : vector<8x16xf32>
    %c0_7 = arith.constant 0 : index
    %c0_8 = arith.constant 0 : index
    %17 = vector.load %arg4[%c0_7, %c0_8] : memref<8x16xf32, #tpu.memory_space<vmem>>, vector<8x16xf32>
    tpu.vector_store %arg4[%c0_7, %c0_8], %16 {strides = array<i32>} : memref<8x16xf32, #tpu.memory_space<vmem>>, vector<8x16xf32>,
    return
  }
  func.func @transform_0(%arg0: i32) -> (i32, i32) {
    %c0_i32 = arith.constant 0 : i32
    %c0_i32_0 = arith.constant 0 : i32
    return %arg0, %c0_i32 : i32, i32
  }
  func.func @transform_1(%arg0: i32) -> (i32, i32) {
    %c0_i32 = arith.constant 0 : i32
    %c0_i32_0 = arith.constant 0 : i32
    %c0_i32_1 = arith.constant 0 : i32
    return %c0_i32, %c0_i32_0 : i32, i32
  }
  func.func @transform_2(%arg0: i32) -> (i32, i32) {
    %c0_i32 = arith.constant 0 : i32
    %c0_i32_0 = arith.constant 0 : i32
    %c0_i32_1 = arith.constant 0 : i32
    return %c0_i32, %c0_i32_0 : i32, i32
  }
  func.func @transform_3(%arg0: i32) -> (i32, i32) {
    %c0_i32 = arith.constant 0 : i32
    %c0_i32_0 = arith.constant 0 : i32
    return %arg0, %c0_i32 : i32, i32
  }
}

</mosaic_0001>

<llo_original>
// kernel: tpu_custom_call.1
$region0: #{tpu_custom_call.1}
  #allocation0 [shape = 'u32[]', space=smem, size = 0x4, offset = 0x4, fixed_abs, tag = 'smem constant byte address 0x4 - core index']
  #allocation1 [shape = 'u32[144,128]{1,0:T(1,128)}', space=vmem, size = 0x12000, scoped, tag = 'internal scratch']
  %s0 = inlined_call_operand.vmem [shape: f32[8,32], index: 0, kind: input, shape index: {}]
  %s1 = inlined_call_operand.vmem [shape: bf16[32,16], index: 1, kind: input, shape index: {}]
  %s2 = inlined_call_operand.vmem [shape: f32[1,16], index: 2, kind: input, shape index: {}]
  %s3 = inlined_call_operand.hbm [shape: f32[8,16], index: 3, kind: output, shape index: {}]
  %s4 = sld [smem:[#allocation0]]
  $region22: #{tpu_custom_call.1} parent=0
    _
  %s6 = ssub.s32 1, %s4
  %s7 = scalar_select 0, %s6, %s4
  $region1: #{tpu_custom_call.1} parent=0
    #allocation2 [shape = 'u8[4096]{0}', space=vmem, size = 0x1000, scoped, tag = 'output window, operand 0, single buffered']
    #allocation3 [shape = 's32[1]{0}', space=sflag, size = 0x4, scoped, tag = 'scoped memory for tpu_custom_call.1']
    %8 = vsyncpa [#allocation3], 0
    // Predicated region
    $region2: #{tpu_custom_call.1} parent=1 // pred_check
      _
    $region3: #{tpu_custom_call.1} parent=1 // pred_check_branch
      %10 = sbr.rel (0) target = $region5
    $region4: #{tpu_custom_call.1} parent=1 // pred_region
      _
    $region5: #{tpu_custom_call.1} parent=1 // pred_fallthru
      _
    // Predicated region
    $region6: #{tpu_custom_call.1} parent=1 // pred_check
      _
    $region7: #{tpu_custom_call.1} parent=1 // pred_check_branch
      %12 = sbr.rel (0) target = $region9
    $region8: #{tpu_custom_call.1} parent=1 // pred_region
      _
    $region9: #{tpu_custom_call.1} parent=1 // pred_fallthru
      _
    // Predicated region
    $region10: #{tpu_custom_call.1} parent=1 // pred_check
      _
    $region11: #{tpu_custom_call.1} parent=1 // pred_check_branch
      %14 = sbr.rel (0) target = $region13
    $region12: #{tpu_custom_call.1} parent=1 // pred_region
      _
    $region13: #{tpu_custom_call.1} parent=1 // pred_fallthru
      _
    %v16 = vld [vmem:[%s0] sm:$0xff]
    %v17 = vpack.c.bf16 %v16, %v16
    %v18 = vld [vmem:[%s1] sm:$0xf]
    %v19 = vld [vmem:[%s1 + $0x4] sm:$0xf]
    %v20 = vld [vmem:[%s1 + $0x8] sm:$0xf]
    %v21 = vld [vmem:[%s1 + $0xc] sm:$0xf]
    %v22 = vld [vmem:[%s2] sm:$0x1]
    %v24 = vlaneseq
    %v25 = vshrl.u32 %v24, 7
    %v26 = vsub.s32 0, %v25
    %v27 = vrot.slane %v22, %v26
    %v33 = vunpack.c.l.b16 %v18
    %v34 = vunpack.c.l.b16 %v19
    %v35 = vunpack.c.l.b16 %v20
    %v36 = vunpack.c.l.b16 %v21
    %v37 = vpack.c.b16 %v34, %v33
    %v38 = vpack.c.b16 %v36, %v35
    %vm41 = vcmask 261120
    %v43 = vsel %vm41, %v17, 0
    %45 = vmatprep.subr.bf16.mxu0 0
    %46 = vmatpush1.bf16.msra.mxu0 %v37
    %47 = vmatprep.subr.bf16.mxu0 0
    %48 = vmatpush1.bf16.msra.mxu0 %v38
    %49 = vmatprep.subr.bf16.mxu0 0
    %50 = vmatpush1.bf16.msra.mxu0 0
    %51 = vmatprep.subr.bf16.mxu0 0
    %52 = vmatpush1.bf16.msra.mxu0 0
    %53 = vmatprep.subr.bf16.mxu0 0
    %54 = vmatpush1.bf16.msra.mxu0 0
    %55 = vmatprep.subr.bf16.mxu0 0
    %56 = vmatpush1.bf16.msra.mxu0 0
    %57 = vmatprep.subr.bf16.mxu0 0
    %58 = vmatpush1.bf16.msra.mxu0 0
    %59 = vmatprep.subr.bf16.mxu0 0
    %60 = vmatpush1.bf16.msra.mxu0 0
    %61 = vmatprep.subr.bf16.mxu0 0
    %62 = vmatpush1.bf16.msra.mxu0 0
    %63 = vmatprep.subr.bf16.mxu0 0
    %64 = vmatpush1.bf16.msra.mxu0 0
    %65 = vmatprep.subr.bf16.mxu0 0
    %66 = vmatpush1.bf16.msra.mxu0 0
    %67 = vmatprep.subr.bf16.mxu0 0
    %68 = vmatpush1.bf16.msra.mxu0 0
    %69 = vmatprep.subr.bf16.mxu0 0
    %70 = vmatpush1.bf16.msra.mxu0 0
    %71 = vmatprep.subr.bf16.mxu0 0
    %72 = vmatpush1.bf16.msra.mxu0 0
    %73 = vmatprep.subr.bf16.mxu0 0
    %74 = vmatpush1.bf16.msra.mxu0 0
    %75 = vmatprep.subr.bf16.mxu0 0
    %76 = vmatpush1.bf16.msra.mxu0 0
    %77 = vmatprep.mubr.bf16.mxu0 0
    %78 = vmatmul.mubr.bf16.gmra.mrb[0].mxu0 %v43
    %v79 = vpop.f32.mrb[0].mxu0
    %v80 = vadd.f32 %v27, %v79
    %v81 = vpop.f32.mrb[0].mxu0
    %v82 = vpop.f32.mrb[0].mxu0
    %v83 = vpop.f32.mrb[0].mxu0
    %84 = vdwg.mxu0
    %vm85 = vcmask 130048
    %v86 = vsel %vm85, %v80, -inf
    %87 = vmax.xlane.f32.xlu0 %v86
    %v88 = vpop.xlane.xlu0 %87
    %v89 = vsub.f32 %v80, %v88
    %v90 = vmul.f32 %v89, 1.442695
    %v91 = vpow.pop %v90
    %v92 = vsel %vm85, %v91, 0.0
    %93 = vadd.xlane.f32.xlu0 %v92
    %v94 = vpop.xlane.xlu0 %93
    %v95 = vlog2.pop %v94
    %v96 = vmul.f32 %v95, 0.6931472
    %v97 = vsub.f32 %v89, %v96
    %98 = vst.msk [vmem:[#allocation2] sm:$0xff] %vm85, %v97
    // Predicated region
    $region14: #{tpu_custom_call.1} parent=1 // pred_check
      _
    $region15: #{tpu_custom_call.1} parent=1 // pred_check_branch
      %100 = sbr.rel (0) target = $region17
    $region16: #{tpu_custom_call.1} parent=1 // pred_region
      %s102 = ssub.s32 128, 128
      %103 = vsyncadd [#allocation3], %s102
      %s105 = sshll.u32 [#allocation2], 4
      %s106 = int_to_ptr.vmem [resolvable:$true] %s105
      %108 = dma.vmem_to_hbm [thread:$0]  %s106, 128, %s3, [#allocation3]
    $region17: #{tpu_custom_call.1} parent=1 // pred_fallthru
      _
    // Predicated region
    $region18: #{tpu_custom_call.1} parent=1 // pred_check
      _
    $region19: #{tpu_custom_call.1} parent=1 // pred_check_branch
      %110 = sbr.rel (0) target = $region21
    $region20: #{tpu_custom_call.1} parent=1 // pred_region
      %111 = dma.done [#allocation3], 128
    $region21: #{tpu_custom_call.1} parent=1 // pred_fallthru
      _
    %112 = vsyncpa [#allocation3], 1

// kernel: tpu_custom_call.1
$region0: #{tpu_custom_call.1}
  #allocation0 [shape = 'u32[]', space=smem, size = 0x4, offset = 0x4, fixed_abs, tag = 'smem constant byte address 0x4 - core index']
  #allocation1 [shape = 'u32[144,128]{1,0:T(1,128)}', space=vmem, size = 0x12000, scoped, tag = 'internal scratch']
  %s0 = inlined_call_operand.vmem [shape: f32[8,32], index: 0, kind: input, shape index: {}]
  %s1 = inlined_call_operand.vmem [shape: bf16[32,16], index: 1, kind: input, shape index: {}]
  %s2 = inlined_call_operand.vmem [shape: f32[1,16], index: 2, kind: input, shape index: {}]
  %s3 = inlined_call_operand.hbm [shape: f32[8,16], index: 3, kind: output, shape index: {}]
  %s4 = sld [smem:[#allocation0]]
  $region22: #{tpu_custom_call.1} parent=0
    _
  %s6 = ssub.s32 1, %s4
  %s7 = scalar_select 0, %s6, %s4
  $region1: #{tpu_custom_call.1} parent=0
    #allocation2 [shape = 'u8[4096]{0}', space=vmem, size = 0x1000, scoped, tag = 'output window, operand 0, single buffered']
    #allocation3 [shape = 's32[1]{0}', space=sflag, size = 0x4, scoped, tag = 'scoped memory for tpu_custom_call.1']
    %8 = vsyncpa [#allocation3], 0
    // Predicated region
    $region2: #{tpu_custom_call.1} parent=1 // pred_check
      _
    $region3: #{tpu_custom_call.1} parent=1 // pred_check_branch
      %10 = sbr.rel (0) target = $region5
    $region4: #{tpu_custom_call.1} parent=1 // pred_region
      _
    $region5: #{tpu_custom_call.1} parent=1 // pred_fallthru
      _
    // Predicated region
    $region6: #{tpu_custom_call.1} parent=1 // pred_check
      _
    $region7: #{tpu_custom_call.1} parent=1 // pred_check_branch
      %12 = sbr.rel (0) target = $region9
    $region8: #{tpu_custom_call.1} parent=1 // pred_region
      _
    $region9: #{tpu_custom_call.1} parent=1 // pred_fallthru
      _
    // Predicated region
    $region10: #{tpu_custom_call.1} parent=1 // pred_check
      _
    $region11: #{tpu_custom_call.1} parent=1 // pred_check_branch
      %14 = sbr.rel (0) target = $region13
    $region12: #{tpu_custom_call.1} parent=1 // pred_region
      _
    $region13: #{tpu_custom_call.1} parent=1 // pred_fallthru
      _
    %v16 = vld [vmem:[%s0] sm:$0xff]
    %v17 = vpack.c.bf16 %v16, %v16
    %v18 = vld [vmem:[%s1] sm:$0xf]
    %v19 = vld [vmem:[%s1 + $0x4] sm:$0xf]
    %v20 = vld [vmem:[%s1 + $0x8] sm:$0xf]
    %v21 = vld [vmem:[%s1 + $0xc] sm:$0xf]
    %v22 = vld [vmem:[%s2] sm:$0x1]
    %v24 = vlaneseq
    %v25 = vshrl.u32 %v24, 7
    %v26 = vsub.s32 0, %v25
    %v27 = vrot.slane %v22, %v26
    %v33 = vunpack.c.l.b16 %v18
    %v34 = vunpack.c.l.b16 %v19
    %v35 = vunpack.c.l.b16 %v20
    %v36 = vunpack.c.l.b16 %v21
    %v37 = vpack.c.b16 %v34, %v33
    %v38 = vpack.c.b16 %v36, %v35
    %vm41 = vcmask 261120
    %v43 = vsel %vm41, %v17, 0
    %45 = vmatprep.subr.bf16.mxu0 0
    %46 = vmatpush1.bf16.msra.mxu0 %v37
    %47 = vmatprep.subr.bf16.mxu0 0
    %48 = vmatpush1.bf16.msra.mxu0 %v38
    %49 = vmatprep.subr.bf16.mxu0 0
    %50 = vmatpush1.bf16.msra.mxu0 0
    %51 = vmatprep.subr.bf16.mxu0 0
    %52 = vmatpush1.bf16.msra.mxu0 0
    %53 = vmatprep.subr.bf16.mxu0 0
    %54 = vmatpush1.bf16.msra.mxu0 0
    %55 = vmatprep.subr.bf16.mxu0 0
    %56 = vmatpush1.bf16.msra.mxu0 0
    %57 = vmatprep.subr.bf16.mxu0 0
    %58 = vmatpush1.bf16.msra.mxu0 0
    %59 = vmatprep.subr.bf16.mxu0 0
    %60 = vmatpush1.bf16.msra.mxu0 0
    %61 = vmatprep.subr.bf16.mxu0 0
    %62 = vmatpush1.bf16.msra.mxu0 0
    %63 = vmatprep.subr.bf16.mxu0 0
    %64 = vmatpush1.bf16.msra.mxu0 0
    %65 = vmatprep.subr.bf16.mxu0 0
    %66 = vmatpush1.bf16.msra.mxu0 0
    %67 = vmatprep.subr.bf16.mxu0 0
    %68 = vmatpush1.bf16.msra.mxu0 0
    %69 = vmatprep.subr.bf16.mxu0 0
    %70 = vmatpush1.bf16.msra.mxu0 0
    %71 = vmatprep.subr.bf16.mxu0 0
    %72 = vmatpush1.bf16.msra.mxu0 0
    %73 = vmatprep.subr.bf16.mxu0 0
    %74 = vmatpush1.bf16.msra.mxu0 0
    %75 = vmatprep.subr.bf16.mxu0 0
    %76 = vmatpush1.bf16.msra.mxu0 0
    %77 = vmatprep.mubr.bf16.mxu0 0
    %78 = vmatmul.mubr.bf16.gmra.mrb[0].mxu0 %v43
    %v79 = vpop.f32.mrb[0].mxu0
    %v80 = vadd.f32 %v27, %v79
    %v81 = vpop.f32.mrb[0].mxu0
    %v82 = vpop.f32.mrb[0].mxu0
    %v83 = vpop.f32.mrb[0].mxu0
    %84 = vdwg.mxu0
    %vm85 = vcmask 130048
    %v86 = vsel %vm85, %v80, -inf
    %87 = vmax.xlane.f32.xlu0 %v86
    %v88 = vpop.xlane.xlu0 %87
    %v89 = vsub.f32 %v80, %v88
    %v90 = vmul.f32 %v89, 1.442695
    %v91 = vpow.pop %v90
    %v92 = vsel %vm85, %v91, 0.0
    %93 = vadd.xlane.f32.xlu0 %v92
    %v94 = vpop.xlane.xlu0 %93
    %v95 = vlog2.pop %v94
    %v96 = vmul.f32 %v95, 0.6931472
    %v97 = vsub.f32 %v89, %v96
    %98 = vst.msk [vmem:[#allocation2] sm:$0xff] %vm85, %v97
    // Predicated region
    $region14: #{tpu_custom_call.1} parent=1 // pred_check
      _
    $region15: #{tpu_custom_call.1} parent=1 // pred_check_branch
      %100 = sbr.rel (0) target = $region17
    $region16: #{tpu_custom_call.1} parent=1 // pred_region
      %s102 = ssub.s32 128, 128
      %103 = vsyncadd [#allocation3], %s102
      %s105 = sshll.u32 [#allocation2], 4
      %s106 = int_to_ptr.vmem [resolvable:$true] %s105
      %108 = dma.vmem_to_hbm [thread:$0]  %s106, 128, %s3, [#allocation3]
    $region17: #{tpu_custom_call.1} parent=1 // pred_fallthru
      _
    // Predicated region
    $region18: #{tpu_custom_call.1} parent=1 // pred_check
      _
    $region19: #{tpu_custom_call.1} parent=1 // pred_check_branch
      %110 = sbr.rel (0) target = $region21
    $region20: #{tpu_custom_call.1} parent=1 // pred_region
      %111 = dma.done [#allocation3], 128
    $region21: #{tpu_custom_call.1} parent=1 // pred_fallthru
      _
    %112 = vsyncpa [#allocation3], 1

</llo_original>
